<compile_context>
chip_gen: v7x
topology: tpu7x:2x2x1
jax: 0.10.0
libtpu: 0.0.40
codegen_flags: <defaults>
</compile_context>

<pallas_src>
import functools

import jax
import jax.numpy as jnp
from jax import lax
from jax.experimental import pallas as pl
from jax.experimental.pallas import tpu as pltpu


def _round_up(x: int, m: int) -> int:
    return ((x + m - 1) // m) * m


def _vmem_capacity_bytes() -> int:
    """Physical VMEM of the local chip; conservative 64 MiB (v7x) fallback."""
    try:
        cap = int(pltpu.get_tpu_info().vmem_capacity_bytes)
        if cap > 0:
            return cap
    except Exception:
        pass
    return 64 * 1024 * 1024


def _head_kernel(x_ref, w_ref, b_ref, o_ref, *, add_norm: bool):
    x = x_ref[...]                                        # (TM, C), input dtype
    # bf16 operands feed the MXU; accumulate in f32.
    y = jnp.dot(x.astype(jnp.bfloat16), w_ref[...],
                preferred_element_type=jnp.float32)       # (TM, TN) f32
    if add_norm:
        # F.normalize(x, dim=-1): x / max(||x||_2, 1e-12)
        #   == x * rsqrt(max(||x||^2, 1e-24))   (rsqrt -> EUP slot)
        # The per-row scale is folded into the matmul *output* rather than the
        # (TM, C) input (fewer VPU multiplies when TN < C, no f32 temp).
        xf = x.astype(jnp.float32)
        ssq = jnp.sum(xf * xf, axis=-1, keepdims=True)
        y = y * lax.rsqrt(jnp.maximum(ssq, 1e-24))
    y = y + b_ref[...]
    # dropout(p=0.0) is the identity (eval semantics).
    # TODO(synk): nonzero train-time dropout would use pltpu.prng_seed +
    # pltpu.stateful_bernoulli.
    o_ref[...] = y.astype(o_ref.dtype)


def prepare_head_params(weight, bias):
    """One-time parameter prep (call at init, NOT per forward pass).

    weight: (num_classes, C) nn.Linear layout; bias: (num_classes,)
    Returns (w_t, b_row): bf16 (C, NC) pre-transposed weight and f32 (1, NC)
    bias, NC = num_classes rounded up to a multiple of 128 for lane-dense
    output stores (no padding when already aligned).
    """
    num_classes, _ = weight.shape
    nc = num_classes if num_classes % 128 == 0 else _round_up(num_classes, 128)
    w_t = weight.T.astype(jnp.bfloat16)                   # (C, num_classes)
    b_row = bias.astype(jnp.float32).reshape(1, num_classes)
    if nc != num_classes:
        w_t = jnp.pad(w_t, ((0, 0), (0, nc - num_classes)))
        b_row = jnp.pad(b_row, ((0, 0), (0, nc - num_classes)))
    return w_t, b_row


def classifier_head(x, w_t, b_row, *, num_classes=None, add_norm: bool = True,
                    tm: int | None = None, tn: int | None = None,
                    out_dtype=None):
    """Forward of Classfier_Head.

    x:     (N, C) activations (f32 or bf16)
    w_t:   (C, NC) bf16 pre-transposed weight from prepare_head_params
    b_row: (1, NC) f32 bias from prepare_head_params
    """
    n, c = x.shape
    nc = w_t.shape[1]
    if num_classes is None:
        num_classes = nc
    # out_dtype=jnp.bfloat16 halves output HBM writes if the consumer accepts it.
    out_dtype = x.dtype if out_dtype is None else out_dtype

    x_b = jnp.dtype(x.dtype).itemsize
    o_b = jnp.dtype(out_dtype).itemsize

    # ---- generation-aware VMEM budget ---------------------------------------
    cap = _vmem_capacity_bytes()           # 64 MiB (v7x) / 128 MiB (v5e/v6e)
    budget = (cap * 3) // 4                # ~48 MiB / ~96 MiB for tiles

    # ---- class tiling (only when the resident weight would not fit) ---------
    if tn is None:
        if nc * (c * 2 + 4) > budget // 2:
            # stream (C, TN) weight tiles; double-buffered tile <= ~budget/2
            tn = max(((budget // 4) // (c * 2 + 4)) // 128 * 128, 128)
        else:
            tn = nc                        # whole weight stays VMEM-resident
    tn = min(tn, nc)

    # ---- row (batch) tiling --------------------------------------------------
    # Weight/bias index_map is constant along the row axis, so with tn == nc it
    # is fetched once; the 2x below is conservative double-buffer accounting.
    resident = 2 * tn * (c * 2 + 4)                       # bf16 W tile + f32 bias
    bytes_per_row = 2 * (c * x_b + tn * o_b)              # double-buffered x + out
    tm_max = max((budget - resident) // bytes_per_row, 8)

    tm_req = 512 if tm is None else tm
    tm_eff = min(tm_req, tm_max, _round_up(n, 8))
    if n >= 256:
        # keep >= 2 row steps: both v7x TensorCores + a live x/out pipeline
        tm_eff = min(tm_eff, _round_up(pl.cdiv(n, 2), 128))
    if tm_eff >= 128:
        tm_eff = (tm_eff // 128) * 128     # MXU-friendly M
    else:
        tm_eff = _round_up(tm_eff, 8)
    tm_eff = max(tm_eff, 16 if n >= 16 else 8)            # bf16 (16,128) packing

    grid = (pl.cdiv(n, tm_eff), pl.cdiv(nc, tn))          # class axis innermost

    vmem_bytes = 2 * tm_eff * (c * x_b + tn * o_b) + resident + (4 << 20)
    vmem_bytes = int(min(max(vmem_bytes, 16 << 20), cap - (8 << 20)))

    kernel = functools.partial(_head_kernel, add_norm=add_norm)

    out = pl.pallas_call(
        kernel,
        out_shape=jax.ShapeDtypeStruct((n, nc), out_dtype),
        grid_spec=pltpu.PrefetchScalarGridSpec(
            num_scalar_prefetch=0,
            grid=grid,
            in_specs=[
                pl.BlockSpec((tm_eff, c), lambda i, j: (i, 0)),   # row tile
                pl.BlockSpec((c, tn), lambda i, j: (0, j)),       # weight tile
                pl.BlockSpec((1, tn), lambda i, j: (0, j)),       # bias tile
            ],
            out_specs=pl.BlockSpec((tm_eff, tn), lambda i, j: (i, j)),
        ),
        compiler_params=pltpu.CompilerParams(
            dimension_semantics=("parallel", "parallel"),
            vmem_limit_bytes=vmem_bytes),
    )(x, w_t, b_row)

    # Rows are exact (cdiv grid); only class padding (if any) needs slicing.
    return out if nc == num_classes else out[:, :num_classes]


if __name__ == "__main__":
    key = jax.random.PRNGKey(0)
    kx, kw, kb, kx2, kw2, kb2 = jax.random.split(key, 6)

    # ---- case 1: small head, auto tiling, padded (16 -> 128) class dim -------
    batch, input_channel, num_classes = 8, 32, 16
    x = jax.random.normal(kx, (batch, input_channel), dtype=jnp.float32)
    bound = 1.0 / (input_channel ** 0.5)
    weight = jax.random.uniform(kw, (num_classes, input_channel),
                                minval=-bound, maxval=bound, dtype=jnp.float32)
    bias = jax.random.uniform(kb, (num_classes,),
                              minval=-bound, maxval=bound, dtype=jnp.float32)

    w_t, b_row = prepare_head_params(weight, bias)        # one-time init
    out = classifier_head(x, w_t, b_row, num_classes=num_classes, add_norm=True)
    out = jax.block_until_ready(out)

    xn = x / jnp.maximum(jnp.linalg.norm(x, axis=-1, keepdims=True), 1e-12)
    ref = xn @ weight.T + bias
    assert out.shape == (batch, num_classes)
    assert jnp.allclose(out, ref, atol=2e-2, rtol=2e-2), \
        float(jnp.max(jnp.abs(out - ref)))

    # ---- case 2: ragged row block + class-tiled 2-D grid (no class padding) --
    batch2, c2, nc2 = 40, 32, 256
    x2 = jax.random.normal(kx2, (batch2, c2), dtype=jnp.float32)
    bound2 = 1.0 / (c2 ** 0.5)
    w2 = jax.random.uniform(kw2, (nc2, c2), minval=-bound2, maxval=bound2,
                            dtype=jnp.float32)
    b2 = jax.random.uniform(kb2, (nc2,), minval=-bound2, maxval=bound2,
                            dtype=jnp.float32)

    w2_t, b2_row = prepare_head_params(w2, b2)
    out2 = classifier_head(x2, w2_t, b2_row, num_classes=nc2, add_norm=True,
                           tm=16, tn=128)                 # force 3x2 grid
    out2 = jax.block_until_ready(out2)

    x2n = x2 / jnp.maximum(jnp.linalg.norm(x2, axis=-1, keepdims=True), 1e-12)
    ref2 = x2n @ w2.T + b2
    assert out2.shape == (batch2, nc2)
    assert jnp.allclose(out2, ref2, atol=2e-2, rtol=2e-2), \
        float(jnp.max(jnp.abs(out2 - ref2)))

    print("KERNEL_OK")
</pallas_src>

<mosaic_0001>
module attributes {stable_mosaic.version = 11 : i64} {
  func.func @_head_kernel(%arg0: i32, %arg1: i32, %arg2: memref<8x32xf32, #tpu.memory_space<vmem>>, %arg3: memref<32x128xbf16, #tpu.memory_space<vmem>>, %arg4: memref<1x128xf32, #tpu.memory_space<vmem>>, %arg5: memref<8x128xf32, #tpu.memory_space<vmem>>) attributes {dimension_semantics = [#tpu.dimension_semantics<parallel>, #tpu.dimension_semantics<parallel>], iteration_bounds = array<i64: 1, 1>, scalar_prefetch = 0 : i64, scratch_operands = 0 : i64, tpu.core_type = #tpu.core_type<tc>, window_params = [{transform_indices = @transform_0, window_bounds = array<i64: 8, 32>}, {transform_indices = @transform_1, window_bounds = array<i64: 32, 128>}, {transform_indices = @transform_2, window_bounds = array<i64: 1, 128>}, {transform_indices = @transform_3, window_bounds = array<i64: 8, 128>}]} {
    %c0 = arith.constant 0 : index
    %c0_0 = arith.constant 0 : index
    %0 = vector.load %arg2[%c0, %c0_0] : memref<8x32xf32, #tpu.memory_space<vmem>>, vector<8x32xf32>
    %1 = arith.truncf %0 : vector<8x32xf32> to vector<8x32xbf16>
    %c0_1 = arith.constant 0 : index
    %c0_2 = arith.constant 0 : index
    %2 = vector.load %arg3[%c0_1, %c0_2] : memref<32x128xbf16, #tpu.memory_space<vmem>>, vector<32x128xbf16>
    %cst = arith.constant dense<0.000000e+00> : vector<8x128xf32>
    %3 = tpu.matmul %1, %2, %cst {dimension_numbers = #tpu.dot_dimension_numbers<[1], [0], [0], [1], [0, 0, 1, 1], [], []>} : vector<8x32xbf16>, vector<32x128xbf16>, vector<8x128xf32> -> vector<8x128xf32>
    %4 = arith.mulf %0, %0 : vector<8x32xf32>
    %cst_3 = arith.constant dense<0.000000e+00> : vector<8xf32>
    %5 = vector.multi_reduction <add>, %4, %cst_3 [1] : vector<8x32xf32> to vector<8xf32>
    %6 = vector.shape_cast %5 : vector<8xf32> to vector<8x1xf32>
    %cst_4 = arith.constant 1.000000e-24 : f32
    %7 = vector.broadcast %cst_4 : f32 to vector<8x1xf32>
    %8 = arith.maximumf %6, %7 : vector<8x1xf32>
    %9 = math.rsqrt %8 : vector<8x1xf32>
    %10 = vector.broadcast %9 : vector<8x1xf32> to vector<8x128xf32>
    %11 = arith.mulf %3, %10 : vector<8x128xf32>
    %c0_5 = arith.constant 0 : index
    %c0_6 = arith.constant 0 : index
    %12 = vector.load %arg4[%c0_5, %c0_6] : memref<1x128xf32, #tpu.memory_space<vmem>>, vector<1x128xf32>
    %13 = vector.broadcast %12 : vector<1x128xf32> to vector<8x128xf32>
    %14 = arith.addf %11, %13 : vector<8x128xf32>
    %c0_7 = arith.constant 0 : index
    %c0_8 = arith.constant 0 : index
    %15 = vector.load %arg5[%c0_7, %c0_8] : memref<8x128xf32, #tpu.memory_space<vmem>>, vector<8x128xf32>
    tpu.vector_store %arg5[%c0_7, %c0_8], %14 {strides = array<i32>} : memref<8x128xf32, #tpu.memory_space<vmem>>, vector<8x128xf32>,
    return
  }
  func.func @transform_0(%arg0: i32, %arg1: i32) -> (i32, i32) {
    %c0_i32 = arith.constant 0 : i32
    %c0_i32_0 = arith.constant 0 : i32
    return %arg0, %c0_i32 : i32, i32
  }
  func.func @transform_1(%arg0: i32, %arg1: i32) -> (i32, i32) {
    %c0_i32 = arith.constant 0 : i32
    %c0_i32_0 = arith.constant 0 : i32
    return %c0_i32, %arg1 : i32, i32
  }
  func.func @transform_2(%arg0: i32, %arg1: i32) -> (i32, i32) {
    %c0_i32 = arith.constant 0 : i32
    %c0_i32_0 = arith.constant 0 : i32
    return %c0_i32, %arg1 : i32, i32
  }
  func.func @transform_3(%arg0: i32, %arg1: i32) -> (i32, i32) {
    %c0_i32 = arith.constant 0 : i32
    return %arg0, %arg1 : i32, i32
  }
}

</mosaic_0001>

<llo_original>
// kernel: tpu_custom_call.1
$region0: #{tpu_custom_call.1}
  #allocation0 [shape = 'u32[]', space=smem, size = 0x4, offset = 0x4, fixed_abs, tag = 'smem constant byte address 0x4 - core index']
  #allocation1 [shape = 'u32[144,128]{1,0:T(1,128)}', space=vmem, size = 0x12000, scoped, tag = 'internal scratch']
  %s0 = inlined_call_operand.hbm [shape: f32[8,32], index: 0, kind: input, shape index: {}]
  %s1 = inlined_call_operand.hbm [shape: bf16[32,128], index: 1, kind: input, shape index: {}]
  %s2 = inlined_call_operand.vmem [shape: f32[1,128], index: 2, kind: input, shape index: {}]
  %s3 = inlined_call_operand.hbm [shape: f32[8,128], index: 3, kind: output, shape index: {}]
  %s4 = sld [smem:[#allocation0]]
  $region30: #{tpu_custom_call.1} parent=0
    _
  %s6 = ssub.s32 1, %s4
  %s7 = scalar_select 0, %s6, %s4
  $region1: #{tpu_custom_call.1} parent=0
    #allocation2 [shape = 'u8[4096]{0}', space=vmem, size = 0x1000, scoped, tag = 'input window, operand 0, single buffered']
    #allocation3 [shape = 's32[1]{0}', space=sflag, size = 0x4, scoped, tag = 'scoped memory for tpu_custom_call.1']
    #allocation4 [shape = 's32[1]{0}', space=sflag, size = 0x4, scoped, tag = 'scoped memory for tpu_custom_call.1']
    #allocation5 [shape = 'u8[8192]{0}', space=vmem, size = 0x2000, scoped, tag = 'input window, operand 1, single buffered']
    #allocation6 [shape = 's32[1]{0}', space=sflag, size = 0x4, scoped, tag = 'scoped memory for tpu_custom_call.1']
    #allocation7 [shape = 'u8[4096]{0}', space=vmem, size = 0x1000, scoped, tag = 'output window, operand 0, single buffered']
    %8 = vsyncpa [#allocation3], 0
    %9 = vsyncpa [#allocation6], 0
    %10 = vsyncpa [#allocation4], 0
    // Predicated region
    $region2: #{tpu_custom_call.1} parent=1 // pred_check
      _
    $region3: #{tpu_custom_call.1} parent=1 // pred_check_branch
      %12 = sbr.rel (0) target = $region5
    $region4: #{tpu_custom_call.1} parent=1 // pred_region
      %s14 = ssub.s32 128, 128
      %15 = vsyncadd [#allocation3], %s14
      %s17 = sshll.u32 [#allocation2], 4
      %s18 = int_to_ptr.vmem [resolvable:$true] %s17
      %20 = dma.hbm_to_vmem [thread:$0]  %s0, 128, %s18, [#allocation3]
    $region5: #{tpu_custom_call.1} parent=1 // pred_fallthru
      _
    // Predicated region
    $region6: #{tpu_custom_call.1} parent=1 // pred_check
      _
    $region7: #{tpu_custom_call.1} parent=1 // pred_check_branch
      %22 = sbr.rel (0) target = $region9
    $region8: #{tpu_custom_call.1} parent=1 // pred_region
      %s24 = ssub.s32 256, 256
      %25 = vsyncadd [#allocation6], %s24
      %s26 = sshll.u32 [#allocation5], 4
      %s27 = int_to_ptr.vmem [resolvable:$true] %s26
      %32 = dma.hbm_to_vmem [thread:$0]  %s1, 256, %s27, [#allocation6], 64, 64, 4
    $region9: #{tpu_custom_call.1} parent=1 // pred_fallthru
      _
    // Predicated region
    $region10: #{tpu_custom_call.1} parent=1 // pred_check
      _
    $region11: #{tpu_custom_call.1} parent=1 // pred_check_branch
      %34 = sbr.rel (0) target = $region13
    $region12: #{tpu_custom_call.1} parent=1 // pred_region
      _
    $region13: #{tpu_custom_call.1} parent=1 // pred_fallthru
      _
    // Predicated region
    $region14: #{tpu_custom_call.1} parent=1 // pred_check
      _
    $region15: #{tpu_custom_call.1} parent=1 // pred_check_branch
      %36 = sbr.rel (0) target = $region17
    $region16: #{tpu_custom_call.1} parent=1 // pred_region
      %37 = dma.done [#allocation3], 128
    $region17: #{tpu_custom_call.1} parent=1 // pred_fallthru
      _
    // Predicated region
    $region18: #{tpu_custom_call.1} parent=1 // pred_check
      _
    $region19: #{tpu_custom_call.1} parent=1 // pred_check_branch
      %39 = sbr.rel (0) target = $region21
    $region20: #{tpu_custom_call.1} parent=1 // pred_region
      %40 = dma.done [#allocation6], 256
    $region21: #{tpu_custom_call.1} parent=1 // pred_fallthru
      _
    %v42 = vld [vmem:[#allocation2] sm:$0xff]
    %v43 = vpack.c.bf16 %v42, %v42
    %v44 = vld [vmem:[#allocation5] sm:$0xf]
    %v45 = vld [vmem:[#allocation5 + $0x4] sm:$0xf]
    %v46 = vld [vmem:[#allocation5 + $0x8] sm:$0xf]
    %v47 = vld [vmem:[#allocation5 + $0xc] sm:$0xf]
    %v52 = vunpack.c.l.b16 %v44
    %v53 = vunpack.c.l.b16 %v45
    %v54 = vunpack.c.l.b16 %v46
    %v55 = vunpack.c.l.b16 %v47
    %v56 = vpack.c.b16 %v53, %v52
    %v57 = vpack.c.b16 %v55, %v54
    %vm60 = vcmask 261120
    %v62 = vsel %vm60, %v43, 0
    %64 = vmatprep.subr.bf16.mxu0 0
    %65 = vmatpush1.bf16.msra.mxu0 %v56
    %66 = vmatprep.subr.bf16.mxu0 0
    %67 = vmatpush1.bf16.msra.mxu0 %v57
    %68 = vmatprep.subr.bf16.mxu0 0
    %69 = vmatpush1.bf16.msra.mxu0 0
    %70 = vmatprep.subr.bf16.mxu0 0
    %71 = vmatpush1.bf16.msra.mxu0 0
    %72 = vmatprep.subr.bf16.mxu0 0
    %73 = vmatpush1.bf16.msra.mxu0 0
    %74 = vmatprep.subr.bf16.mxu0 0
    %75 = vmatpush1.bf16.msra.mxu0 0
    %76 = vmatprep.subr.bf16.mxu0 0
    %77 = vmatpush1.bf16.msra.mxu0 0
    %78 = vmatprep.subr.bf16.mxu0 0
    %79 = vmatpush1.bf16.msra.mxu0 0
    %80 = vmatprep.subr.bf16.mxu0 0
    %81 = vmatpush1.bf16.msra.mxu0 0
    %82 = vmatprep.subr.bf16.mxu0 0
    %83 = vmatpush1.bf16.msra.mxu0 0
    %84 = vmatprep.subr.bf16.mxu0 0
    %85 = vmatpush1.bf16.msra.mxu0 0
    %86 = vmatprep.subr.bf16.mxu0 0
    %87 = vmatpush1.bf16.msra.mxu0 0
    %88 = vmatprep.subr.bf16.mxu0 0
    %89 = vmatpush1.bf16.msra.mxu0 0
    %90 = vmatprep.subr.bf16.mxu0 0
    %91 = vmatpush1.bf16.msra.mxu0 0
    %92 = vmatprep.subr.bf16.mxu0 0
    %93 = vmatpush1.bf16.msra.mxu0 0
    %94 = vmatprep.subr.bf16.mxu0 0
    %95 = vmatpush1.bf16.msra.mxu0 0
    %96 = vmatprep.mubr.bf16.mxu0 0
    %97 = vmatmul.mubr.bf16.gmra.mrb[0].mxu0 %v62
    %v98 = vpop.f32.mrb[0].mxu0
    %v99 = vadd.f32 0.0, %v98
    %v100 = vpop.f32.mrb[0].mxu0
    %v101 = vpop.f32.mrb[0].mxu0
    %v102 = vpop.f32.mrb[0].mxu0
    %103 = vdwg.mxu0
    %v104 = vmul.f32 %v42, %v42
    %v105 = vsel %vm60, %v104, 0.0
    %106 = vadd.xlane.f32.xlu0 %v105
    %v107 = vpop.xlane.xlu0 %106
    %v108 = vmax.f32 %v107, 1e-24
    %v109 = vrsqrt.pop %v108
    %v110 = vmul.f32 %v99, %v109
    %v111 = vld [vmem:[%s2] sm:$0x1]
    %v113 = vlaneseq
    %v114 = vshrl.u32 %v113, 7
    %v115 = vsub.s32 0, %v114
    %v116 = vrot.slane %v111, %v115
    %v118 = vadd.f32 %v110, %v116
    %119 = vst [vmem:[#allocation7] sm:$0xff] %v118
    // Predicated region
    $region22: #{tpu_custom_call.1} parent=1 // pred_check
      _
    $region23: #{tpu_custom_call.1} parent=1 // pred_check_branch
      %121 = sbr.rel (0) target = $region25
    $region24: #{tpu_custom_call.1} parent=1 // pred_region
      %s123 = ssub.s32 128, 128
      %124 = vsyncadd [#allocation4], %s123
      %s126 = sshll.u32 [#allocation7], 4
      %s127 = int_to_ptr.vmem [resolvable:$true] %s126
      %129 = dma.vmem_to_hbm [thread:$0]  %s127, 128, %s3, [#allocation4]
    $region25: #{tpu_custom_call.1} parent=1 // pred_fallthru
      _
    // Predicated region
    $region26: #{tpu_custom_call.1} parent=1 // pred_check
      _
    $region27: #{tpu_custom_call.1} parent=1 // pred_check_branch
      %131 = sbr.rel (0) target = $region29
    $region28: #{tpu_custom_call.1} parent=1 // pred_region
      %132 = dma.done [#allocation4], 128
    $region29: #{tpu_custom_call.1} parent=1 // pred_fallthru
      _
    %133 = vsyncpa [#allocation3], 1
    %134 = vsyncpa [#allocation6], 1
    %135 = vsyncpa [#allocation4], 1

</llo_original>
